<compile_context>
chip_gen: v7x
topology: tpu7x:2x2x1
jax: 0.10.0
libtpu: 0.0.40
codegen_flags: <defaults>
</compile_context>

<pallas_src>
import jax
import jax.numpy as jnp
from jax import lax
from jax.experimental import pallas as pl
from jax.experimental.pallas import tpu as pltpu


# ---------------------------------------------------------------------------
# Generation-aware VMEM budget / TensorCore count.
# ---------------------------------------------------------------------------
def _tpu_params():
    """Returns (vmem_limit_bytes, num_tensorcores_per_chip) with safe fallbacks."""
    try:
        vmem_cap = int(pltpu.get_tpu_info().vmem_capacity_bytes)
        # v7x exposes 64 MiB per TensorCore and has 2 TCs; v5e/v6e: 128 MiB, 1 TC.
        num_tc = 2 if vmem_cap <= 64 * 1024 * 1024 else 1
    except Exception:
        vmem_cap = 64 * 1024 * 1024   # conservative: fits every generation
        num_tc = 1
    vmem_limit = (vmem_cap * 3) // 4  # headroom for compiler internal scratch
    return vmem_limit, num_tc


def _pick_bb(batch, s_in, d_in, s_out, d_out, hidden, vmem_budget, num_tc):
    """Largest batch tile that divides `batch`, fits the VMEM budget, and keeps
    the grid shardable across all TensorCores on multi-TC chips."""
    bf16, f32 = 2, 4
    # grid-invariant, single-buffered weights/biases
    weight_bytes = (d_in * hidden + d_out * hidden + hidden * d_out) * bf16 \
                   + (hidden + d_out) * f32

    def per_step_bytes(bb):
        acts = 2 * bb * (s_in * d_in + s_out * d_out) * bf16    # double-buffered ins
        outs = 2 * bb * s_out * d_out * f32                     # double-buffered out
        inter = bb * (s_in * hidden * (bf16 + f32)              # memory f32 + bf16
                      + s_out * hidden * (bf16 + f32)           # q
                      + 3 * s_out * s_in * f32                  # scores / exp / att
                      + s_out * hidden * f32                    # ctx
                      + s_out * d_out * f32)                    # pre-store out
        return acts + outs + inter

    best = 1
    for bb in range(1, batch + 1):
        if batch % bb:
            continue
        grid = batch // bb
        if num_tc > 1 and (grid < num_tc or grid % num_tc):
            continue                       # keep both v7x TensorCores load-balanced
        if weight_bytes + per_step_bytes(bb) <= vmem_budget:
            best = max(best, bb)
    return best


def _const_spec(shape):
    """BlockSpec for a grid-invariant operand; single-buffered when supported."""
    idx = lambda b: (0,) * len(shape)
    try:
        return pl.BlockSpec(shape, idx, pipeline_mode=pl.Buffered(1))
    except TypeError:                      # older jax without pipeline_mode
        return pl.BlockSpec(shape, idx)


# ---------------------------------------------------------------------------
# Kernel bodies.  Activations/weights arrive as bf16; biases stay f32.
# ---------------------------------------------------------------------------
def _attend(mem_bf, prev_ref, wq_ref, wo_ref, bo_ref, out_ref):
    """Cross-attention decoder body. mem_bf: (bb, s_in, H) bf16 value."""
    bb, s_in, h_dim = mem_bf.shape
    _, s_out, d_out = prev_ref.shape

    prev2 = prev_ref[...].reshape(bb * s_out, d_out)               # bf16
    q = jnp.dot(prev2, wq_ref[...], preferred_element_type=jnp.float32)
    q3 = q.reshape(bb, s_out, h_dim).astype(jnp.bfloat16)

    # scores[b,t,s] = sum_h q[b,t,h] * mem[b,s,h]   (no explicit mem.T relayout)
    scores = lax.dot_general(
        q3, mem_bf,
        dimension_numbers=(((2,), (2,)), ((0,), (0,))),
        preferred_element_type=jnp.float32)                        # (bb, s_out, s_in)

    # softmax over the memory axis (f32); reciprocal on the EUP slot
    m = jnp.max(scores, axis=-1, keepdims=True)
    e = jnp.exp(scores - m)
    denom = jnp.sum(e, axis=-1, keepdims=True)
    att = e * pl.reciprocal(denom, approx=True)
    # TODO(synk): add a -inf score mask if S_in/S_out ever get padded to
    # lane/sublane multiples (padded memory rows are tanh(b_enc) != 0).

    # ctx[b,t,h] = sum_s att[b,t,s] * mem[b,s,h]
    ctx = lax.dot_general(
        att.astype(jnp.bfloat16), mem_bf,
        dimension_numbers=(((2,), (1,)), ((0,), (0,))),
        preferred_element_type=jnp.float32)                        # (bb, s_out, H)

    ctx2 = ctx.reshape(bb * s_out, h_dim).astype(jnp.bfloat16)
    out = jnp.dot(ctx2, wo_ref[...], preferred_element_type=jnp.float32) \
          + bo_ref[...]
    out_ref[...] = out.reshape(bb, s_out, d_out).astype(out_ref.dtype)


def _fused_kernel(x_ref, prev_ref, we_ref, be_ref, wq_ref, wo_ref, bo_ref,
                  out_ref):
    bb, s_in, d_in = x_ref.shape
    h_dim = we_ref.shape[1]
    # encoder: memory = tanh(x @ W_enc + b_enc); batch flattened into sublanes
    x2 = x_ref[...].reshape(bb * s_in, d_in)                       # bf16
    h = jnp.dot(x2, we_ref[...], preferred_element_type=jnp.float32) + be_ref[...]
    mem_bf = jnp.tanh(h).reshape(bb, s_in, h_dim).astype(jnp.bfloat16)
    _attend(mem_bf, prev_ref, wq_ref, wo_ref, bo_ref, out_ref)


def _decoder_kernel(mem_ref, prev_ref, wq_ref, wo_ref, bo_ref, out_ref):
    _attend(mem_ref[...], prev_ref, wq_ref, wo_ref, bo_ref, out_ref)


# ---------------------------------------------------------------------------
# pallas_call wrappers.
# ---------------------------------------------------------------------------
def seq2seq_fused_forward(in_features, prev_out, w_enc, b_enc, w_q, w_out,
                          b_out):
    B, S_in, D_in = in_features.shape
    _, S_out, D_out = prev_out.shape
    H = w_enc.shape[1]

    vmem_limit, num_tc = _tpu_params()
    BB = _pick_bb(B, S_in, D_in, S_out, D_out, H, vmem_limit - (4 << 20), num_tc)
    grid = (B // BB,)

    x_bf = in_features.astype(jnp.bfloat16)
    prev_bf = prev_out.astype(jnp.bfloat16)

    flops = 2 * B * (S_in * D_in * H + S_out * D_out * H
                     + 2 * S_out * S_in * H + S_out * H * D_out)
    transcendentals = B * (S_in * H + S_out * S_in + S_out)
    bytes_accessed = (x_bf.size * 2 + prev_bf.size * 2
                      + (D_in * H + D_out * H + H * D_out) * 2
                      + (H + D_out) * 4
                      + B * S_out * D_out * 4)

    return pl.pallas_call(
        _fused_kernel,
        out_shape=jax.ShapeDtypeStruct((B, S_out, D_out), jnp.float32),
        grid_spec=pltpu.PrefetchScalarGridSpec(
            num_scalar_prefetch=0,
            grid=grid,
            in_specs=[
                pl.BlockSpec((BB, S_in, D_in), lambda b: (b, 0, 0)),
                pl.BlockSpec((BB, S_out, D_out), lambda b: (b, 0, 0)),
                _const_spec((D_in, H)),
                _const_spec((1, H)),
                _const_spec((D_out, H)),
                _const_spec((H, D_out)),
                _const_spec((1, D_out)),
            ],
            out_specs=pl.BlockSpec((BB, S_out, D_out), lambda b: (b, 0, 0)),
        ),
        compiler_params=pltpu.CompilerParams(
            dimension_semantics=("parallel",),
            vmem_limit_bytes=vmem_limit),
        cost_estimate=pl.CostEstimate(
            flops=flops, transcendentals=transcendentals,
            bytes_accessed=bytes_accessed),
    )(x_bf, prev_bf, w_enc, b_enc, w_q, w_out, b_out)


def decoder_forward(memory, prev_out, w_q, w_out, b_out):
    B, S_in, H = memory.shape
    _, S_out, D_out = prev_out.shape

    vmem_limit, num_tc = _tpu_params()
    BB = _pick_bb(B, S_in, H, S_out, D_out, H, vmem_limit - (4 << 20), num_tc)
    grid = (B // BB,)

    mem_bf = memory.astype(jnp.bfloat16)
    prev_bf = prev_out.astype(jnp.bfloat16)

    flops = 2 * B * (S_out * D_out * H + 2 * S_out * S_in * H + S_out * H * D_out)
    transcendentals = B * (S_out * S_in + S_out)
    bytes_accessed = (mem_bf.size * 2 + prev_bf.size * 2
                      + (D_out * H + H * D_out) * 2 + D_out * 4
                      + B * S_out * D_out * 4)

    return pl.pallas_call(
        _decoder_kernel,
        out_shape=jax.ShapeDtypeStruct((B, S_out, D_out), jnp.float32),
        grid_spec=pltpu.PrefetchScalarGridSpec(
            num_scalar_prefetch=0,
            grid=grid,
            in_specs=[
                pl.BlockSpec((BB, S_in, H), lambda b: (b, 0, 0)),
                pl.BlockSpec((BB, S_out, D_out), lambda b: (b, 0, 0)),
                _const_spec((D_out, H)),
                _const_spec((H, D_out)),
                _const_spec((1, D_out)),
            ],
            out_specs=pl.BlockSpec((BB, S_out, D_out), lambda b: (b, 0, 0)),
        ),
        compiler_params=pltpu.CompilerParams(
            dimension_semantics=("parallel",),
            vmem_limit_bytes=vmem_limit),
        cost_estimate=pl.CostEstimate(
            flops=flops, transcendentals=transcendentals,
            bytes_accessed=bytes_accessed),
    )(mem_bf, prev_bf, w_q, w_out, b_out)


# ---------------------------------------------------------------------------
# Seq2Seq wrapper (mirrors the PyTorch forward semantics, typos fixed)
# ---------------------------------------------------------------------------
class Seq2Seq:
    def __init__(self, d_in, hidden, d_out, key):
        k1, k2, k3 = jax.random.split(key, 3)
        scale_e = 1.0 / jnp.sqrt(jnp.float32(d_in))
        # fold the attention 1/sqrt(H) scale into W_q at construction time
        scale_q = (1.0 / jnp.sqrt(jnp.float32(d_out))) * \
                  (1.0 / jnp.sqrt(jnp.float32(hidden)))
        scale_o = 1.0 / jnp.sqrt(jnp.float32(hidden))
        # weights stored in bf16 (half the DMA, no per-step in-kernel casts);
        # biases stay f32 (negligible bytes, adds done in f32).
        self.w_enc = (jax.random.normal(k1, (d_in, hidden), jnp.float32)
                      * scale_e).astype(jnp.bfloat16)
        self.b_enc = jnp.zeros((1, hidden), jnp.float32)
        self.w_q = (jax.random.normal(k2, (d_out, hidden), jnp.float32)
                    * scale_q).astype(jnp.bfloat16)
        self.w_out = (jax.random.normal(k3, (hidden, d_out), jnp.float32)
                      * scale_o).astype(jnp.bfloat16)
        self.b_out = jnp.zeros((1, d_out), jnp.float32)

    def forward(self, in_features, prev_out_features, memory=None):
        if memory is None:
            # fused path: encoder output never leaves VMEM
            return seq2seq_fused_forward(
                in_features, prev_out_features,
                self.w_enc, self.b_enc, self.w_q, self.w_out, self.b_out)
        return decoder_forward(memory, prev_out_features,
                               self.w_q, self.w_out, self.b_out)


# ---------------------------------------------------------------------------
# Pure-JAX reference mirroring the kernel numerics (bf16 matmuls, f32 accum)
# ---------------------------------------------------------------------------
def _reference(model, in_features, prev_out, memory=None):
    bf = lambda t: t.astype(jnp.bfloat16)
    if memory is None:
        h = jnp.einsum("bsd,dh->bsh", bf(in_features), model.w_enc,
                       preferred_element_type=jnp.float32) + model.b_enc
        memory = jnp.tanh(h)
    mem_b = bf(memory)
    q = jnp.einsum("btd,dh->bth", bf(prev_out), model.w_q,
                   preferred_element_type=jnp.float32)
    scores = jnp.einsum("bth,bsh->bts", bf(q), mem_b,
                        preferred_element_type=jnp.float32)
    att = jax.nn.softmax(scores, axis=-1)
    ctx = jnp.einsum("bts,bsh->bth", bf(att), mem_b,
                     preferred_element_type=jnp.float32)
    return jnp.einsum("bth,hd->btd", bf(ctx), model.w_out,
                      preferred_element_type=jnp.float32) + model.b_out


if __name__ == "__main__":
    key = jax.random.PRNGKey(0)
    k_model, k_in, k_prev = jax.random.split(key, 3)

    # lane-dense feature dims (multiples of 128); small demo sequence lengths
    B, S_in, S_out = 2, 16, 8
    D_in, H, D_out = 128, 128, 128

    model = Seq2Seq(D_in, H, D_out, k_model)

    in_features = jax.random.normal(k_in, (B, S_in, D_in), jnp.float32)
    prev_out = jax.random.normal(k_prev, (B, S_out, D_out), jnp.float32)

    # ---- memory=None path (fused encoder+decoder kernel) -------------------
    out = jax.block_until_ready(model.forward(in_features, prev_out))
    ref = _reference(model, in_features, prev_out)
    assert out.shape == (B, S_out, D_out)
    assert jnp.allclose(out, ref, atol=2e-2, rtol=2e-2), "fused path mismatch"

    # ---- memory provided path (decoder-only kernel) -------------------------
    memory = jnp.tanh(
        jnp.einsum("bsd,dh->bsh", in_features.astype(jnp.bfloat16), model.w_enc,
                   preferred_element_type=jnp.float32) + model.b_enc)
    out2 = jax.block_until_ready(model.forward(in_features, prev_out, memory))
    ref2 = _reference(model, in_features, prev_out, memory)
    assert out2.shape == (B, S_out, D_out)
    assert jnp.allclose(out2, ref2, atol=2e-2, rtol=2e-2), "decoder path mismatch"

    print("KERNEL_OK")
</pallas_src>

<mosaic_0001>
module attributes {stable_mosaic.version = 11 : i64} {
  func.func @_fused_kernel(%arg0: i32, %arg1: memref<2x16x128xbf16, #tpu.memory_space<vmem>>, %arg2: memref<2x8x128xbf16, #tpu.memory_space<vmem>>, %arg3: memref<128x128xbf16, #tpu.memory_space<vmem>>, %arg4: memref<1x128xf32, #tpu.memory_space<vmem>>, %arg5: memref<128x128xbf16, #tpu.memory_space<vmem>>, %arg6: memref<128x128xbf16, #tpu.memory_space<vmem>>, %arg7: memref<1x128xf32, #tpu.memory_space<vmem>>, %arg8: memref<2x8x128xf32, #tpu.memory_space<vmem>>) attributes {dimension_semantics = [#tpu.dimension_semantics<parallel>], iteration_bounds = array<i64: 1>, scalar_prefetch = 0 : i64, scratch_operands = 0 : i64, tpu.core_type = #tpu.core_type<tc>, window_params = [{transform_indices = @transform_0, window_bounds = array<i64: 2, 16, 128>}, {transform_indices = @transform_1, window_bounds = array<i64: 2, 8, 128>}, {pipeline_mode = #tpu.pipeline_mode<synchronous>, transform_indices = @transform_2, window_bounds = array<i64: 128, 128>}, {pipeline_mode = #tpu.pipeline_mode<synchronous>, transform_indices = @transform_3, window_bounds = array<i64: 1, 128>}, {pipeline_mode = #tpu.pipeline_mode<synchronous>, transform_indices = @transform_4, window_bounds = array<i64: 128, 128>}, {pipeline_mode = #tpu.pipeline_mode<synchronous>, transform_indices = @transform_5, window_bounds = array<i64: 128, 128>}, {pipeline_mode = #tpu.pipeline_mode<synchronous>, transform_indices = @transform_6, window_bounds = array<i64: 1, 128>}, {transform_indices = @transform_7, window_bounds = array<i64: 2, 8, 128>}]} {
    %c0 = arith.constant 0 : index
    %c0_0 = arith.constant 0 : index
    %c0_1 = arith.constant 0 : index
    %0 = vector.load %arg1[%c0, %c0_0, %c0_1] : memref<2x16x128xbf16, #tpu.memory_space<vmem>>, vector<2x16x128xbf16>
    %1 = vector.shape_cast %0 : vector<2x16x128xbf16> to vector<32x128xbf16>
    %c0_2 = arith.constant 0 : index
    %c0_3 = arith.constant 0 : index
    %2 = vector.load %arg3[%c0_2, %c0_3] : memref<128x128xbf16, #tpu.memory_space<vmem>>, vector<128x128xbf16>
    %cst = arith.constant dense<0.000000e+00> : vector<32x128xf32>
    %3 = tpu.matmul %1, %2, %cst {dimension_numbers = #tpu.dot_dimension_numbers<[1], [0], [0], [1], [0, 0, 1, 1], [], []>} : vector<32x128xbf16>, vector<128x128xbf16>, vector<32x128xf32> -> vector<32x128xf32>
    %c0_4 = arith.constant 0 : index
    %c0_5 = arith.constant 0 : index
    %4 = vector.load %arg4[%c0_4, %c0_5] : memref<1x128xf32, #tpu.memory_space<vmem>>, vector<1x128xf32>
    %5 = vector.broadcast %4 : vector<1x128xf32> to vector<32x128xf32>
    %6 = arith.addf %3, %5 : vector<32x128xf32>
    %7 = math.tanh %6 : vector<32x128xf32>
    %8 = vector.shape_cast %7 : vector<32x128xf32> to vector<2x16x128xf32>
    %9 = arith.truncf %8 : vector<2x16x128xf32> to vector<2x16x128xbf16>
    %c0_6 = arith.constant 0 : index
    %c0_7 = arith.constant 0 : index
    %c0_8 = arith.constant 0 : index
    %10 = vector.load %arg2[%c0_6, %c0_7, %c0_8] : memref<2x8x128xbf16, #tpu.memory_space<vmem>>, vector<2x8x128xbf16>
    %11 = vector.shape_cast %10 : vector<2x8x128xbf16> to vector<16x128xbf16>
    %c0_9 = arith.constant 0 : index
    %c0_10 = arith.constant 0 : index
    %12 = vector.load %arg5[%c0_9, %c0_10] : memref<128x128xbf16, #tpu.memory_space<vmem>>, vector<128x128xbf16>
    %cst_11 = arith.constant dense<0.000000e+00> : vector<16x128xf32>
    %13 = tpu.matmul %11, %12, %cst_11 {dimension_numbers = #tpu.dot_dimension_numbers<[1], [0], [0], [1], [0, 0, 1, 1], [], []>} : vector<16x128xbf16>, vector<128x128xbf16>, vector<16x128xf32> -> vector<16x128xf32>
    %14 = vector.shape_cast %13 : vector<16x128xf32> to vector<2x8x128xf32>
    %15 = arith.truncf %14 : vector<2x8x128xf32> to vector<2x8x128xbf16>
    %cst_12 = arith.constant dense<0.000000e+00> : vector<2x8x16xf32>
    %16 = tpu.matmul %15, %9, %cst_12 {dimension_numbers = #tpu.dot_dimension_numbers<[2], [2], [1], [1], [0, 0, 0, 1, 1, 1], [0], [0]>} : vector<2x8x128xbf16>, vector<2x16x128xbf16>, vector<2x8x16xf32> -> vector<2x8x16xf32>
    %cst_13 = arith.constant dense<0xFF800000> : vector<2x8xf32>
    %17 = vector.multi_reduction <maximumf>, %16, %cst_13 [2] : vector<2x8x16xf32> to vector<2x8xf32>
    %18 = vector.shape_cast %17 : vector<2x8xf32> to vector<2x8x1xf32>
    %19 = vector.broadcast %18 : vector<2x8x1xf32> to vector<2x8x16xf32>
    %20 = arith.subf %16, %19 : vector<2x8x16xf32>
    %21 = math.exp %20 : vector<2x8x16xf32>
    %cst_14 = arith.constant dense<0.000000e+00> : vector<2x8xf32>
    %22 = vector.multi_reduction <add>, %21, %cst_14 [2] : vector<2x8x16xf32> to vector<2x8xf32>
    %23 = vector.shape_cast %22 : vector<2x8xf32> to vector<2x8x1xf32>
    %24 = tpu.reciprocal %23 {approx = true} : vector<2x8x1xf32> -> vector<2x8x1xf32>
    %25 = vector.broadcast %24 : vector<2x8x1xf32> to vector<2x8x16xf32>
    %26 = arith.mulf %21, %25 : vector<2x8x16xf32>
    %27 = arith.truncf %26 : vector<2x8x16xf32> to vector<2x8x16xbf16>
    %cst_15 = arith.constant dense<0.000000e+00> : vector<2x8x128xf32>
    %28 = tpu.matmul %27, %9, %cst_15 {dimension_numbers = #tpu.dot_dimension_numbers<[2], [1], [1], [2], [0, 0, 0, 1, 1, 2], [0], [0]>} : vector<2x8x16xbf16>, vector<2x16x128xbf16>, vector<2x8x128xf32> -> vector<2x8x128xf32>
    %29 = vector.shape_cast %28 : vector<2x8x128xf32> to vector<16x128xf32>
    %30 = arith.truncf %29 : vector<16x128xf32> to vector<16x128xbf16>
    %c0_16 = arith.constant 0 : index
    %c0_17 = arith.constant 0 : index
    %31 = vector.load %arg6[%c0_16, %c0_17] : memref<128x128xbf16, #tpu.memory_space<vmem>>, vector<128x128xbf16>
    %cst_18 = arith.constant dense<0.000000e+00> : vector<16x128xf32>
    %32 = tpu.matmul %30, %31, %cst_18 {dimension_numbers = #tpu.dot_dimension_numbers<[1], [0], [0], [1], [0, 0, 1, 1], [], []>} : vector<16x128xbf16>, vector<128x128xbf16>, vector<16x128xf32> -> vector<16x128xf32>
    %c0_19 = arith.constant 0 : index
    %c0_20 = arith.constant 0 : index
    %33 = vector.load %arg7[%c0_19, %c0_20] : memref<1x128xf32, #tpu.memory_space<vmem>>, vector<1x128xf32>
    %34 = vector.broadcast %33 : vector<1x128xf32> to vector<16x128xf32>
    %35 = arith.addf %32, %34 : vector<16x128xf32>
    %36 = vector.shape_cast %35 : vector<16x128xf32> to vector<2x8x128xf32>
    %c0_21 = arith.constant 0 : index
    %c0_22 = arith.constant 0 : index
    %c0_23 = arith.constant 0 : index
    %37 = vector.load %arg8[%c0_21, %c0_22, %c0_23] : memref<2x8x128xf32, #tpu.memory_space<vmem>>, vector<2x8x128xf32>
    tpu.vector_store %arg8[%c0_21, %c0_22, %c0_23], %36 {strides = array<i32>} : memref<2x8x128xf32, #tpu.memory_space<vmem>>, vector<2x8x128xf32>,
    return
  }
  func.func @transform_0(%arg0: i32) -> (i32, i32, i32) {
    %c0_i32 = arith.constant 0 : i32
    %c0_i32_0 = arith.constant 0 : i32
    %c0_i32_1 = arith.constant 0 : i32
    return %arg0, %c0_i32, %c0_i32_0 : i32, i32, i32
  }
  func.func @transform_1(%arg0: i32) -> (i32, i32, i32) {
    %c0_i32 = arith.constant 0 : i32
    %c0_i32_0 = arith.constant 0 : i32
    %c0_i32_1 = arith.constant 0 : i32
    return %arg0, %c0_i32, %c0_i32_0 : i32, i32, i32
  }
  func.func @transform_2(%arg0: i32) -> (i32, i32) {
    %c0_i32 = arith.constant 0 : i32
    %c0_i32_0 = arith.constant 0 : i32
    %c0_i32_1 = arith.constant 0 : i32
    return %c0_i32, %c0_i32_0 : i32, i32
  }
  func.func @transform_3(%arg0: i32) -> (i32, i32) {
    %c0_i32 = arith.constant 0 : i32
    %c0_i32_0 = arith.constant 0 : i32
    %c0_i32_1 = arith.constant 0 : i32
    return %c0_i32, %c0_i32_0 : i32, i32
  }
  func.func @transform_4(%arg0: i32) -> (i32, i32) {
    %c0_i32 = arith.constant 0 : i32
    %c0_i32_0 = arith.constant 0 : i32
    %c0_i32_1 = arith.constant 0 : i32
    return %c0_i32, %c0_i32_0 : i32, i32
  }
  func.func @transform_5(%arg0: i32) -> (i32, i32) {
    %c0_i32 = arith.constant 0 : i32
    %c0_i32_0 = arith.constant 0 : i32
    %c0_i32_1 = arith.constant 0 : i32
    return %c0_i32, %c0_i32_0 : i32, i32
  }
  func.func @transform_6(%arg0: i32) -> (i32, i32) {
    %c0_i32 = arith.constant 0 : i32
    %c0_i32_0 = arith.constant 0 : i32
    %c0_i32_1 = arith.constant 0 : i32
    return %c0_i32, %c0_i32_0 : i32, i32
  }
  func.func @transform_7(%arg0: i32) -> (i32, i32, i32) {
    %c0_i32 = arith.constant 0 : i32
    %c0_i32_0 = arith.constant 0 : i32
    %c0_i32_1 = arith.constant 0 : i32
    return %arg0, %c0_i32, %c0_i32_0 : i32, i32, i32
  }
}

</mosaic_0001>

<llo_original>
// kernel: tpu_custom_call.1
$region0: #{tpu_custom_call.1}
  #allocation0 [shape = 'u32[]', space=smem, size = 0x4, offset = 0x4, fixed_abs, tag = 'smem constant byte address 0x4 - core index']
  #allocation1 [shape = 'u32[144,128]{1,0:T(1,128)}', space=vmem, size = 0x12000, scoped, tag = 'internal scratch']
  %s0 = inlined_call_operand.hbm [shape: bf16[2,16,128], index: 0, kind: input, shape index: {}]
  %s1 = inlined_call_operand.hbm [shape: bf16[2,8,128], index: 1, kind: input, shape index: {}]
  %s2 = inlined_call_operand.hbm [shape: bf16[128,128], index: 2, kind: input, shape index: {}]
  %s3 = inlined_call_operand.vmem [shape: f32[1,128], index: 3, kind: input, shape index: {}]
  %s4 = inlined_call_operand.hbm [shape: bf16[128,128], index: 4, kind: input, shape index: {}]
  %s5 = inlined_call_operand.hbm [shape: bf16[128,128], index: 5, kind: input, shape index: {}]
  %s6 = inlined_call_operand.vmem [shape: f32[1,128], index: 6, kind: input, shape index: {}]
  %s7 = inlined_call_operand.hbm [shape: f32[2,8,128], index: 7, kind: output, shape index: {}]
  %s8 = sld [smem:[#allocation0]]
  $region58: #{tpu_custom_call.1} parent=0
    _
  %s10 = ssub.s32 1, %s8
  %s11 = scalar_select 0, %s10, %s8
  $region1: #{tpu_custom_call.1} parent=0
    #allocation2 [shape = 'u8[8192]{0}', space=vmem, size = 0x2000, scoped, tag = 'input window, operand 0, single buffered']
    #allocation3 [shape = 's32[1]{0}', space=sflag, size = 0x4, scoped, tag = 'scoped memory for tpu_custom_call.1']
    #allocation4 [shape = 's32[1]{0}', space=sflag, size = 0x4, scoped, tag = 'scoped memory for tpu_custom_call.1']
    #allocation5 [shape = 'u8[4096]{0}', space=vmem, size = 0x1000, scoped, tag = 'input window, operand 1, single buffered']
    #allocation6 [shape = 's32[1]{0}', space=sflag, size = 0x4, scoped, tag = 'scoped memory for tpu_custom_call.1']
    #allocation7 [shape = 'u8[32768]{0}', space=vmem, size = 0x8000, scoped, tag = 'input window, operand 2, single buffered']
    #allocation8 [shape = 'u8[32768]{0}', space=vmem, size = 0x8000, scoped, tag = 'input window, operand 4, single buffered']
    #allocation9 [shape = 's32[1]{0}', space=sflag, size = 0x4, scoped, tag = 'scoped memory for tpu_custom_call.1']
    #allocation10 [shape = 'u8[32768]{0}', space=vmem, size = 0x8000, scoped, tag = 'input window, operand 5, single buffered']
    #allocation11 [shape = 'u8[8192]{0}', space=vmem, size = 0x2000, scoped, tag = 'output window, operand 0, single buffered']
    %12 = vsyncpa [#allocation3], 0
    %13 = vsyncpa [#allocation6], 0
    %14 = vsyncpa [#allocation9], 0
    %15 = vsyncpa [#allocation4], 0
    // Predicated region
    $region2: #{tpu_custom_call.1} parent=1 // pred_check
      _
    $region3: #{tpu_custom_call.1} parent=1 // pred_check_branch
      %17 = sbr.rel (0) target = $region5
    $region4: #{tpu_custom_call.1} parent=1 // pred_region
      %s19 = ssub.s32 256, 256
      %20 = vsyncadd [#allocation3], %s19
      %s21 = sshll.u32 [#allocation2], 4
      %s22 = int_to_ptr.vmem [resolvable:$true] %s21
      %27 = dma.hbm_to_vmem [thread:$0]  %s0, 256, %s22, [#allocation3], 64, 64, 4
    $region5: #{tpu_custom_call.1} parent=1 // pred_fallthru
      _
    // Predicated region
    $region6: #{tpu_custom_call.1} parent=1 // pred_check
      _
    $region7: #{tpu_custom_call.1} parent=1 // pred_check_branch
      %29 = sbr.rel (0) target = $region9
    $region8: #{tpu_custom_call.1} parent=1 // pred_region
      %s31 = ssub.s32 128, 128
      %32 = vsyncadd [#allocation6], %s31
      %s33 = sshll.u32 [#allocation5], 4
      %s34 = int_to_ptr.vmem [resolvable:$true] %s33
      %39 = dma.hbm_to_vmem [thread:$0]  %s1, 128, %s34, [#allocation6], 64, 64, 4
    $region9: #{tpu_custom_call.1} parent=1 // pred_fallthru
      _
    // Predicated region
    $region10: #{tpu_custom_call.1} parent=1 // pred_check
      _
    $region11: #{tpu_custom_call.1} parent=1 // pred_check_branch
      %41 = sbr.rel (0) target = $region13
    $region12: #{tpu_custom_call.1} parent=1 // pred_region
      %s43 = ssub.s32 1024, 1024
      %44 = vsyncadd [#allocation6], %s43
      %s45 = sshll.u32 [#allocation7], 4
      %s46 = int_to_ptr.vmem [resolvable:$true] %s45
      %51 = dma.hbm_to_vmem [thread:$0]  %s2, 1024, %s46, [#allocation6], 64, 64, 4
    $region13: #{tpu_custom_call.1} parent=1 // pred_fallthru
      _
    // Predicated region
    $region14: #{tpu_custom_call.1} parent=1 // pred_check
      _
    $region15: #{tpu_custom_call.1} parent=1 // pred_check_branch
      %53 = sbr.rel (0) target = $region17
    $region16: #{tpu_custom_call.1} parent=1 // pred_region
      _
    $region17: #{tpu_custom_call.1} parent=1 // pred_fallthru
      _
    // Predicated region
    $region18: #{tpu_custom_call.1} parent=1 // pred_check
      _
    $region19: #{tpu_custom_call.1} parent=1 // pred_check_branch
      %55 = sbr.rel (0) target = $region21
    $region20: #{tpu_custom_call.1} parent=1 // pred_region
      %s57 = ssub.s32 1024, 1024
      %58 = vsyncadd [#allocation9], %s57
      %s59 = sshll.u32 [#allocation8], 4
      %s60 = int_to_ptr.vmem [resolvable:$true] %s59
      %65 = dma.hbm_to_vmem [thread:$0]  %s4, 1024, %s60, [#allocation9], 64, 64, 4
    $region21: #{tpu_custom_call.1} parent=1 // pred_fallthru
      _
    // Predicated region
    $region22: #{tpu_custom_call.1} parent=1 // pred_check
      _
    $region23: #{tpu_custom_call.1} parent=1 // pred_check_branch
      %67 = sbr.rel (0) target = $region25
    $region24: #{tpu_custom_call.1} parent=1 // pred_region
      %s69 = ssub.s32 1024, 1024
      %70 = vsyncadd [#allocation9], %s69
      %s71 = sshll.u32 [#allocation10], 4
      %s72 = int_to_ptr.vmem [resolvable:$true] %s71
      %77 = dma.hbm_to_vmem [thread:$0]  %s5, 1024, %s72, [#allocation9], 64, 64, 4
    $region25: #{tpu_custom_call.1} parent=1 // pred_fallthru
      _
    // Predicated region
    $region26: #{tpu_custom_call.1} parent=1 // pred_check
      _
    $region27: #{tpu_custom_call.1} parent=1 // pred_check_branch
      %79 = sbr.rel (0) target = $region29
    $region28: #{tpu_custom_call.1} parent=1 // pred_region
      _
    $region29: #{tpu_custom_call.1} parent=1 // pred_fallthru
      _
    // Predicated region
    $region30: #{tpu_custom_call.1} parent=1 // pred_check
      _
    $region31: #{tpu_custom_call.1} parent=1 // pred_check_branch
      %81 = sbr.rel (0) target = $region33
    $region32: #{tpu_custom_call.1} parent=1 // pred_region
      %82 = dma.done [#allocation3], 256
    $region33: #{tpu_custom_call.1} parent=1 // pred_fallthru
      _
    // Predicated region
    $region34: #{tpu_custom_call.1} parent=1 // pred_check
      _
    $region35: #{tpu_custom_call.1} parent=1 // pred_check_branch
      %84 = sbr.rel (0) target = $region37
    $region36: #{tpu_custom_call.1} parent=1 // pred_region
      %85 = dma.done [#allocation6], 128
    $region37: #{tpu_custom_call.1} parent=1 // pred_fallthru
      _
    // Predicated region
    $region38: #{tpu_custom_call.1} parent=1 // pred_check
      _
    $region39: #{tpu_custom_call.1} parent=1 // pred_check_branch
      %87 = sbr.rel (0) target = $region41
    $region40: #{tpu_custom_call.1} parent=1 // pred_region
      %88 = dma.done [#allocation6], 1024
    $region41: #{tpu_custom_call.1} parent=1 // pred_fallthru
      _
    // Predicated region
    $region42: #{tpu_custom_call.1} parent=1 // pred_check
      _
    $region43: #{tpu_custom_call.1} parent=1 // pred_check_branch
      %90 = sbr.rel (0) target = $region45
    $region44: #{tpu_custom_call.1} parent=1 // pred_region
      %91 = dma.done [#allocation9], 1024
    $region45: #{tpu_custom_call.1} parent=1 // pred_fallthru
      _
    // Predicated region
    $region46: #{tpu_custom_call.1} parent=1 // pred_check
      _
    $region47: #{tpu_custom_call.1} parent=1 // pred_check_branch
      %93 = sbr.rel (0) target = $region49
    $region48: #{tpu_custom_call.1} parent=1 // pred_region
      %94 = dma.done [#allocation9], 1024
    $region49: #{tpu_custom_call.1} parent=1 // pred_fallthru
      _
    %v96 = vld [vmem:[#allocation2] sm:$0xf]
    %v97 = vld [vmem:[#allocation2 + $0x4] sm:$0xf]
    %v98 = vld [vmem:[#allocation2 + $0x8] sm:$0xf]
    %v99 = vld [vmem:[#allocation2 + $0xc] sm:$0xf]
    %v100 = vld [vmem:[#allocation7] sm:$0xf]
    %v101 = vld [vmem:[#allocation7 + $0x4] sm:$0xf]
    %v102 = vld [vmem:[#allocation7 + $0x8] sm:$0xf]
    %v103 = vld [vmem:[#allocation7 + $0xc] sm:$0xf]
    %v104 = vld [vmem:[#allocation7 + $0x10] sm:$0xf]
    %v105 = vld [vmem:[#allocation7 + $0x14] sm:$0xf]
    %v106 = vld [vmem:[#allocation7 + $0x18] sm:$0xf]
    %v107 = vld [vmem:[#allocation7 + $0x1c] sm:$0xf]
    %v108 = vld [vmem:[#allocation7 + $0x20] sm:$0xf]
    %v109 = vld [vmem:[#allocation7 + $0x24] sm:$0xf]
    %v110 = vld [vmem:[#allocation7 + $0x28] sm:$0xf]
    %v111 = vld [vmem:[#allocation7 + $0x2c] sm:$0xf]
    %v112 = vld [vmem:[#allocation7 + $0x30] sm:$0xf]
    %v113 = vld [vmem:[#allocation7 + $0x34] sm:$0xf]
    %v114 = vld [vmem:[#allocation7 + $0x38] sm:$0xf]
    %v115 = vld [vmem:[#allocation7 + $0x3c] sm:$0xf]
    %v116 = vld [vmem:[%s3] sm:$0x1]
    %v118 = vlaneseq
    %v119 = vshrl.u32 %v118, 7
    %v120 = vsub.s32 0, %v119
    %v121 = vrot.slane %v116, %v120
    %v127 = vunpack.c.l.b16 %v96
    %v128 = vunpack.c.l.b16 %v97
    %v129 = vunpack.c.l.b16 %v98
    %v130 = vunpack.c.l.b16 %v99
    %v131 = vpack.c.b16 %v128, %v127
    %v132 = vpack.c.b16 %v130, %v129
    %v151 = vunpack.c.l.b16 %v100
    %v152 = vunpack.c.l.b16 %v101
    %v153 = vunpack.c.l.b16 %v102
    %v154 = vunpack.c.l.b16 %v103
    %v155 = vunpack.c.l.b16 %v104
    %v156 = vunpack.c.l.b16 %v105
    %v157 = vunpack.c.l.b16 %v106
    %v158 = vunpack.c.l.b16 %v107
    %v159 = vunpack.c.l.b16 %v108
    %v160 = vunpack.c.l.b16 %v109
    %v161 = vunpack.c.l.b16 %v110
    %v162 = vunpack.c.l.b16 %v111
    %v163 = vunpack.c.l.b16 %v112
    %v164 = vunpack.c.l.b16 %v113
    %v165 = vunpack.c.l.b16 %v114
    %v166 = vunpack.c.l.b16 %v115
    %v167 = vpack.c.b16 %v152, %v151
    %v168 = vpack.c.b16 %v154, %v153
    %v169 = vpack.c.b16 %v156, %v155
    %v170 = vpack.c.b16 %v158, %v157
    %v171 = vpack.c.b16 %v160, %v159
    %v172 = vpack.c.b16 %v162, %v161
    %v173 = vpack.c.b16 %v164, %v163
    %v174 = vpack.c.b16 %v166, %v165
    %183 = vmatprep.subr.bf16.mxu0 0
    %184 = vmatpush1.bf16.msra.mxu0 %v167
    %185 = vmatprep.subr.bf16.mxu0 0
    %186 = vmatpush1.bf16.msra.mxu0 %v168
    %187 = vmatprep.subr.bf16.mxu0 0
    %188 = vmatpush1.bf16.msra.mxu0 %v169
    %189 = vmatprep.subr.bf16.mxu0 0
    %190 = vmatpush1.bf16.msra.mxu0 %v170
    %191 = vmatprep.subr.bf16.mxu0 0
    %192 = vmatpush1.bf16.msra.mxu0 %v171
    %193 = vmatprep.subr.bf16.mxu0 0
    %194 = vmatpush1.bf16.msra.mxu0 %v172
    %195 = vmatprep.subr.bf16.mxu0 0
    %196 = vmatpush1.bf16.msra.mxu0 %v173
    %197 = vmatprep.subr.bf16.mxu0 0
    %198 = vmatpush1.bf16.msra.mxu0 %v174
    %199 = vmatprep.subr.bf16.mxu0 0
    %200 = vmatpush1.bf16.msra.mxu0 0
    %201 = vmatprep.subr.bf16.mxu0 0
    %202 = vmatpush1.bf16.msra.mxu0 0
    %203 = vmatprep.subr.bf16.mxu0 0
    %204 = vmatpush1.bf16.msra.mxu0 0
    %205 = vmatprep.subr.bf16.mxu0 0
    %206 = vmatpush1.bf16.msra.mxu0 0
    %207 = vmatprep.subr.bf16.mxu0 0
    %208 = vmatpush1.bf16.msra.mxu0 0
    %209 = vmatprep.subr.bf16.mxu0 0
    %210 = vmatpush1.bf16.msra.mxu0 0
    %211 = vmatprep.subr.bf16.mxu0 0
    %212 = vmatpush1.bf16.msra.mxu0 0
    %213 = vmatprep.subr.bf16.mxu0 0
    %214 = vmatpush1.bf16.msra.mxu0 0
    %215 = vmatprep.mubr.bf16.mxu0 0
    %216 = vmatmul.mubr.bf16.gmra.mrb[0].mxu0 %v131
    %v217 = vpop.f32.mrb[0].mxu0
    %v218 = vadd.f32 %v121, %v217
    %v219 = vpop.f32.mrb[0].mxu0
    %v220 = vpop.f32.mrb[0].mxu0
    %v221 = vadd.f32 %v121, %v220
    %v222 = vpop.f32.mrb[0].mxu0
    %223 = vmatprep.mubr.bf16.mxu0 0
    %224 = vmatmul.mubr.bf16.gmra.mrb[0].mxu0 %v132
    %v225 = vpop.f32.mrb[0].mxu0
    %v226 = vadd.f32 %v121, %v225
    %v227 = vpop.f32.mrb[0].mxu0
    %v228 = vpop.f32.mrb[0].mxu0
    %v229 = vadd.f32 %v121, %v228
    %v230 = vpop.f32.mrb[0].mxu0
    %231 = vdwg.mxu0
    %v232 = vtanh.pop %v218
    %v233 = vtanh.pop %v221
    %v234 = vtanh.pop %v226
    %v235 = vtanh.pop %v229
    %v236 = vpack.c.bf16 %v233, %v232
    %v237 = vpack.c.bf16 %v235, %v234
    %v238 = vld [vmem:[#allocation5] sm:$0xf]
    %v239 = vld [vmem:[#allocation5 + $0x4] sm:$0xf]
    %v240 = vld [vmem:[#allocation8] sm:$0xf]
    %v241 = vld [vmem:[#allocation8 + $0x4] sm:$0xf]
    %v242 = vld [vmem:[#allocation8 + $0x8] sm:$0xf]
    %v243 = vld [vmem:[#allocation8 + $0xc] sm:$0xf]
    %v244 = vld [vmem:[#allocation8 + $0x10] sm:$0xf]
    %v245 = vld [vmem:[#allocation8 + $0x14] sm:$0xf]
    %v246 = vld [vmem:[#allocation8 + $0x18] sm:$0xf]
    %v247 = vld [vmem:[#allocation8 + $0x1c] sm:$0xf]
    %v248 = vld [vmem:[#allocation8 + $0x20] sm:$0xf]
    %v249 = vld [vmem:[#allocation8 + $0x24] sm:$0xf]
    %v250 = vld [vmem:[#allocation8 + $0x28] sm:$0xf]
    %v251 = vld [vmem:[#allocation8 + $0x2c] sm:$0xf]
    %v252 = vld [vmem:[#allocation8 + $0x30] sm:$0xf]
    %v253 = vld [vmem:[#allocation8 + $0x34] sm:$0xf]
    %v254 = vld [vmem:[#allocation8 + $0x38] sm:$0xf]
    %v255 = vld [vmem:[#allocation8 + $0x3c] sm:$0xf]
    %v258 = vunpack.c.l.b16 %v238
    %v259 = vunpack.c.l.b16 %v239
    %v260 = vpack.c.b16 %v259, %v258
    %v278 = vunpack.c.l.b16 %v240
    %v279 = vunpack.c.l.b16 %v241
    %v280 = vunpack.c.l.b16 %v242
    %v281 = vunpack.c.l.b16 %v243
    %v282 = vunpack.c.l.b16 %v244
    %v283 = vunpack.c.l.b16 %v245
    %v284 = vunpack.c.l.b16 %v246
    %v285 = vunpack.c.l.b16 %v247
    %v286 = vunpack.c.l.b16 %v248
    %v287 = vunpack.c.l.b16 %v249
    %v288 = vunpack.c.l.b16 %v250
    %v289 = vunpack.c.l.b16 %v251
    %v290 = vunpack.c.l.b16 %v252
    %v291 = vunpack.c.l.b16 %v253
    %v292 = vunpack.c.l.b16 %v254
    %v293 = vunpack.c.l.b16 %v255
    %v294 = vpack.c.b16 %v279, %v278
    %v295 = vpack.c.b16 %v281, %v280
    %v296 = vpack.c.b16 %v283, %v282
    %v297 = vpack.c.b16 %v285, %v284
    %v298 = vpack.c.b16 %v287, %v286
    %v299 = vpack.c.b16 %v289, %v288
    %v300 = vpack.c.b16 %v291, %v290
    %v301 = vpack.c.b16 %v293, %v292
    %310 = vmatprep.subr.bf16.mxu0 0
    %311 = vmatpush1.bf16.msra.mxu0 %v294
    %312 = vmatprep.subr.bf16.mxu0 0
    %313 = vmatpush1.bf16.msra.mxu0 %v295
    %314 = vmatprep.subr.bf16.mxu0 0
    %315 = vmatpush1.bf16.msra.mxu0 %v296
    %316 = vmatprep.subr.bf16.mxu0 0
    %317 = vmatpush1.bf16.msra.mxu0 %v297
    %318 = vmatprep.subr.bf16.mxu0 0
    %319 = vmatpush1.bf16.msra.mxu0 %v298
    %320 = vmatprep.subr.bf16.mxu0 0
    %321 = vmatpush1.bf16.msra.mxu0 %v299
    %322 = vmatprep.subr.bf16.mxu0 0
    %323 = vmatpush1.bf16.msra.mxu0 %v300
    %324 = vmatprep.subr.bf16.mxu0 0
    %325 = vmatpush1.bf16.msra.mxu0 %v301
    %326 = vmatprep.subr.bf16.mxu0 0
    %327 = vmatpush1.bf16.msra.mxu0 0
    %328 = vmatprep.subr.bf16.mxu0 0
    %329 = vmatpush1.bf16.msra.mxu0 0
    %330 = vmatprep.subr.bf16.mxu0 0
    %331 = vmatpush1.bf16.msra.mxu0 0
    %332 = vmatprep.subr.bf16.mxu0 0
    %333 = vmatpush1.bf16.msra.mxu0 0
    %334 = vmatprep.subr.bf16.mxu0 0
    %335 = vmatpush1.bf16.msra.mxu0 0
    %336 = vmatprep.subr.bf16.mxu0 0
    %337 = vmatpush1.bf16.msra.mxu0 0
    %338 = vmatprep.subr.bf16.mxu0 0
    %339 = vmatpush1.bf16.msra.mxu0 0
    %340 = vmatprep.subr.bf16.mxu0 0
    %341 = vmatpush1.bf16.msra.mxu0 0
    %342 = vmatprep.mubr.bf16.mxu0 0
    %343 = vmatmul.mubr.bf16.gmra.mrb[0].mxu0 %v260
    %v344 = vpop.f32.mrb[0].mxu0
    %v345 = vadd.f32 0.0, %v344
    %v346 = vpop.f32.mrb[0].mxu0
    %v347 = vpop.f32.mrb[0].mxu0
    %v348 = vadd.f32 0.0, %v347
    %v349 = vpop.f32.mrb[0].mxu0
    %350 = vdwg.mxu0
    %v351 = vpack.c.bf16 %v345, %v345
    %v352 = vpack.c.bf16 %v348, %v348
    %353 = vmatprep.subr.bf16.mxu0 0
    %354 = vmatpush1.bf16.xpose.msra.mxu0 %v236
    %355 = vmatprep.subr.bf16.mxu0 0
    %356 = vmatpush1.bf16.xpose.msra.mxu0 0
    %357 = vmatprep.subr.bf16.mxu0 0
    %358 = vmatpush1.bf16.xpose.msra.mxu0 0
    %359 = vmatprep.subr.bf16.mxu0 0
    %360 = vmatpush1.bf16.xpose.msra.mxu0 0
    %361 = vmatprep.subr.bf16.mxu0 0
    %362 = vmatpush1.bf16.xpose.msra.mxu0 0
    %363 = vmatprep.subr.bf16.mxu0 0
    %364 = vmatpush1.bf16.xpose.msra.mxu0 0
    %365 = vmatprep.subr.bf16.mxu0 0
    %366 = vmatpush1.bf16.xpose.msra.mxu0 0
    %367 = vmatprep.subr.bf16.mxu0 0
    %368 = vmatpush1.bf16.xpose.msra.mxu0 0
    %369 = vmatprep.subr.bf16.mxu0 0
    %370 = vmatpush1.bf16.xpose.msra.mxu0 0
    %371 = vmatprep.subr.bf16.mxu0 0
    %372 = vmatpush1.bf16.xpose.msra.mxu0 0
    %373 = vmatprep.subr.bf16.mxu0 0
    %374 = vmatpush1.bf16.xpose.msra.mxu0 0
    %375 = vmatprep.subr.bf16.mxu0 0
    %376 = vmatpush1.bf16.xpose.msra.mxu0 0
    %377 = vmatprep.subr.bf16.mxu0 0
    %378 = vmatpush1.bf16.xpose.msra.mxu0 0
    %379 = vmatprep.subr.bf16.mxu0 0
    %380 = vmatpush1.bf16.xpose.msra.mxu0 0
    %381 = vmatprep.subr.bf16.mxu0 0
    %382 = vmatpush1.bf16.xpose.msra.mxu0 0
    %383 = vmatprep.subr.bf16.mxu0 0
    %384 = vmatpush1.bf16.xpose.msra.mxu0 0
    %385 = vmatprep.mubr.bf16.mxu0 0
    %386 = vmatmul.mubr.bf16.gmra.mrb[0].mxu0 %v351
    %v387 = vpop.f32.mrb[0].mxu0
    %v388 = vadd.f32 0.0, %v387
    %v389 = vpop.f32.mrb[0].mxu0
    %v390 = vpop.f32.mrb[0].mxu0
    %v391 = vpop.f32.mrb[0].mxu0
    %392 = vdwg.mxu0
    %393 = vmatprep.subr.bf16.mxu0 0
    %394 = vmatpush1.bf16.xpose.msra.mxu0 %v237
    %395 = vmatprep.subr.bf16.mxu0 0
    %396 = vmatpush1.bf16.xpose.msra.mxu0 0
    %397 = vmatprep.subr.bf16.mxu0 0
    %398 = vmatpush1.bf16.xpose.msra.mxu0 0
    %399 = vmatprep.subr.bf16.mxu0 0
    %400 = vmatpush1.bf16.xpose.msra.mxu0 0
    %401 = vmatprep.subr.bf16.mxu0 0
    %402 = vmatpush1.bf16.xpose.msra.mxu0 0
    %403 = vmatprep.subr.bf16.mxu0 0
    %404 = vmatpush1.bf16.xpose.msra.mxu0 0
    %405 = vmatprep.subr.bf16.mxu0 0
    %406 = vmatpush1.bf16.xpose.msra.mxu0 0
    %407 = vmatprep.subr.bf16.mxu0 0
    %408 = vmatpush1.bf16.xpose.msra.mxu0 0
    %409 = vmatprep.subr.bf16.mxu0 0
    %410 = vmatpush1.bf16.xpose.msra.mxu0 0
    %411 = vmatprep.subr.bf16.mxu0 0
    %412 = vmatpush1.bf16.xpose.msra.mxu0 0
    %413 = vmatprep.subr.bf16.mxu0 0
    %414 = vmatpush1.bf16.xpose.msra.mxu0 0
    %415 = vmatprep.subr.bf16.mxu0 0
    %416 = vmatpush1.bf16.xpose.msra.mxu0 0
    %417 = vmatprep.subr.bf16.mxu0 0
    %418 = vmatpush1.bf16.xpose.msra.mxu0 0
    %419 = vmatprep.subr.bf16.mxu0 0
    %420 = vmatpush1.bf16.xpose.msra.mxu0 0
    %421 = vmatprep.subr.bf16.mxu0 0
    %422 = vmatpush1.bf16.xpose.msra.mxu0 0
    %423 = vmatprep.subr.bf16.mxu0 0
    %424 = vmatpush1.bf16.xpose.msra.mxu0 0
    %425 = vmatprep.mubr.bf16.mxu0 0
    %426 = vmatmul.mubr.bf16.gmra.mrb[0].mxu0 %v352
    %v427 = vpop.f32.mrb[0].mxu0
    %v428 = vadd.f32 0.0, %v427
    %v429 = vpop.f32.mrb[0].mxu0
    %v430 = vpop.f32.mrb[0].mxu0
    %v431 = vpop.f32.mrb[0].mxu0
    %432 = vdwg.mxu0
    %vm433 = vcmask 130048
    %v434 = vsel %vm433, %v388, -inf
    %435 = vmax.xlane.f32.xlu0 %v434
    %v436 = vpop.xlane.xlu0 %435
    %v437 = vsel %vm433, %v428, -inf
    %438 = vmax.xlane.f32.xlu0 %v437
    %v439 = vpop.xlane.xlu0 %438
    %v440 = vsub.f32 %v388, %v436
    %v441 = vsub.f32 %v428, %v439
    %v442 = vmul.f32 %v440, 1.442695
    %v443 = vpow.pop %v442
    %v444 = vmul.f32 %v441, 1.442695
    %v445 = vpow.pop %v444
    %v446 = vsel %vm433, %v443, 0.0
    %447 = vadd.xlane.f32.xlu0 %v446
    %v448 = vpop.xlane.xlu0 %447
    %v449 = vsel %vm433, %v445, 0.0
    %450 = vadd.xlane.f32.xlu0 %v449
    %v451 = vpop.xlane.xlu0 %450
    %v452 = vrcp.pop %v448
    %v453 = vrcp.pop %v451
    %v454 = vmul.f32 %v443, %v452
    %v455 = vmul.f32 %v445, %v453
    %v456 = vpack.c.bf16 %v454, %v454
    %v457 = vpack.c.bf16 %v455, %v455
    %v459 = vsel %vm433, %v456, 0
    %461 = vmatprep.subr.bf16.mxu0 0
    %462 = vmatpush1.bf16.msra.mxu0 %v236
    %463 = vmatprep.subr.bf16.mxu0 0
    %464 = vmatpush1.bf16.msra.mxu0 0
    %465 = vmatprep.subr.bf16.mxu0 0
    %466 = vmatpush1.bf16.msra.mxu0 0
    %467 = vmatprep.subr.bf16.mxu0 0
    %468 = vmatpush1.bf16.msra.mxu0 0
    %469 = vmatprep.subr.bf16.mxu0 0
    %470 = vmatpush1.bf16.msra.mxu0 0
    %471 = vmatprep.subr.bf16.mxu0 0
    %472 = vmatpush1.bf16.msra.mxu0 0
    %473 = vmatprep.subr.bf16.mxu0 0
    %474 = vmatpush1.bf16.msra.mxu0 0
    %475 = vmatprep.subr.bf16.mxu0 0
    %476 = vmatpush1.bf16.msra.mxu0 0
    %477 = vmatprep.subr.bf16.mxu0 0
    %478 = vmatpush1.bf16.msra.mxu0 0
    %479 = vmatprep.subr.bf16.mxu0 0
    %480 = vmatpush1.bf16.msra.mxu0 0
    %481 = vmatprep.subr.bf16.mxu0 0
    %482 = vmatpush1.bf16.msra.mxu0 0
    %483 = vmatprep.subr.bf16.mxu0 0
    %484 = vmatpush1.bf16.msra.mxu0 0
    %485 = vmatprep.subr.bf16.mxu0 0
    %486 = vmatpush1.bf16.msra.mxu0 0
    %487 = vmatprep.subr.bf16.mxu0 0
    %488 = vmatpush1.bf16.msra.mxu0 0
    %489 = vmatprep.subr.bf16.mxu0 0
    %490 = vmatpush1.bf16.msra.mxu0 0
    %491 = vmatprep.subr.bf16.mxu0 0
    %492 = vmatpush1.bf16.msra.mxu0 0
    %493 = vmatprep.mubr.bf16.mxu0 0
    %494 = vmatmul.mubr.bf16.gmra.mrb[0].mxu0 %v459
    %v495 = vpop.f32.mrb[0].mxu0
    %v496 = vadd.f32 0.0, %v495
    %v497 = vpop.f32.mrb[0].mxu0
    %v498 = vpop.f32.mrb[0].mxu0
    %v499 = vpop.f32.mrb[0].mxu0
    %500 = vdwg.mxu0
    %v502 = vsel %vm433, %v457, 0
    %504 = vmatprep.subr.bf16.mxu0 0
    %505 = vmatpush1.bf16.msra.mxu0 %v237
    %506 = vmatprep.subr.bf16.mxu0 0
    %507 = vmatpush1.bf16.msra.mxu0 0
    %508 = vmatprep.subr.bf16.mxu0 0
    %509 = vmatpush1.bf16.msra.mxu0 0
    %510 = vmatprep.subr.bf16.mxu0 0
    %511 = vmatpush1.bf16.msra.mxu0 0
    %512 = vmatprep.subr.bf16.mxu0 0
    %513 = vmatpush1.bf16.msra.mxu0 0
    %514 = vmatprep.subr.bf16.mxu0 0
    %515 = vmatpush1.bf16.msra.mxu0 0
    %516 = vmatprep.subr.bf16.mxu0 0
    %517 = vmatpush1.bf16.msra.mxu0 0
    %518 = vmatprep.subr.bf16.mxu0 0
    %519 = vmatpush1.bf16.msra.mxu0 0
    %520 = vmatprep.subr.bf16.mxu0 0
    %521 = vmatpush1.bf16.msra.mxu0 0
    %522 = vmatprep.subr.bf16.mxu0 0
    %523 = vmatpush1.bf16.msra.mxu0 0
    %524 = vmatprep.subr.bf16.mxu0 0
    %525 = vmatpush1.bf16.msra.mxu0 0
    %526 = vmatprep.subr.bf16.mxu0 0
    %527 = vmatpush1.bf16.msra.mxu0 0
    %528 = vmatprep.subr.bf16.mxu0 0
    %529 = vmatpush1.bf16.msra.mxu0 0
    %530 = vmatprep.subr.bf16.mxu0 0
    %531 = vmatpush1.bf16.msra.mxu0 0
    %532 = vmatprep.subr.bf16.mxu0 0
    %533 = vmatpush1.bf16.msra.mxu0 0
    %534 = vmatprep.subr.bf16.mxu0 0
    %535 = vmatpush1.bf16.msra.mxu0 0
    %536 = vmatprep.mubr.bf16.mxu0 0
    %537 = vmatmul.mubr.bf16.gmra.mrb[0].mxu0 %v502
    %v538 = vpop.f32.mrb[0].mxu0
    %v539 = vadd.f32 0.0, %v538
    %v540 = vpop.f32.mrb[0].mxu0
    %v541 = vpop.f32.mrb[0].mxu0
    %v542 = vpop.f32.mrb[0].mxu0
    %543 = vdwg.mxu0
    %v544 = vpack.c.bf16 %v539, %v496
    %v545 = vld [vmem:[#allocation10] sm:$0xf]
    %v546 = vld [vmem:[#allocation10 + $0x4] sm:$0xf]
    %v547 = vld [vmem:[#allocation10 + $0x8] sm:$0xf]
    %v548 = vld [vmem:[#allocation10 + $0xc] sm:$0xf]
    %v549 = vld [vmem:[#allocation10 + $0x10] sm:$0xf]
    %v550 = vld [vmem:[#allocation10 + $0x14] sm:$0xf]
    %v551 = vld [vmem:[#allocation10 + $0x18] sm:$0xf]
    %v552 = vld [vmem:[#allocation10 + $0x1c] sm:$0xf]
    %v553 = vld [vmem:[#allocation10 + $0x20] sm:$0xf]
    %v554 = vld [vmem:[#allocation10 + $0x24] sm:$0xf]
    %v555 = vld [vmem:[#allocation10 + $0x28] sm:$0xf]
    %v556 = vld [vmem:[#allocation10 + $0x2c] sm:$0xf]
    %v557 = vld [vmem:[#allocation10 + $0x30] sm:$0xf]
    %v558 = vld [vmem:[#allocation10 + $0x34] sm:$0xf]
    %v559 = vld [vmem:[#allocation10 + $0x38] sm:$0xf]
    %v560 = vld [vmem:[#allocation10 + $0x3c] sm:$0xf]
    %v561 = vld [vmem:[%s6] sm:$0x1]
    %v563 = vlaneseq
    %v564 = vshrl.u32 %v563, 7
    %v565 = vsub.s32 0, %v564
    %v566 = vrot.slane %v561, %v565
    %v584 = vunpack.c.l.b16 %v545
    %v585 = vunpack.c.l.b16 %v546
    %v586 = vunpack.c.l.b16 %v547
    %v587 = vunpack.c.l.b16 %v548
    %v588 = vunpack.c.l.b16 %v549
    %v589 = vunpack.c.l.b16 %v550
    %v590 = vunpack.c.l.b16 %v551
    %v591 = vunpack.c.l.b16 %v552
    %v592 = vunpack.c.l.b16 %v553
    %v593 = vunpack.c.l.b16 %v554
    %v594 = vunpack.c.l.b16 %v555
    %v595 = vunpack.c.l.b16 %v556
    %v596 = vunpack.c.l.b16 %v557
    %v597 = vunpack.c.l.b16 %v558
    %v598 = vunpack.c.l.b16 %v559
    %v599 = vunpack.c.l.b16 %v560
    %v600 = vpack.c.b16 %v585, %v584
    %v601 = vpack.c.b16 %v587, %v586
    %v602 = vpack.c.b16 %v589, %v588
    %v603 = vpack.c.b16 %v591, %v590
    %v604 = vpack.c.b16 %v593, %v592
    %v605 = vpack.c.b16 %v595, %v594
    %v606 = vpack.c.b16 %v597, %v596
    %v607 = vpack.c.b16 %v599, %v598
    %616 = vmatprep.subr.bf16.mxu0 0
    %617 = vmatpush1.bf16.msra.mxu0 %v600
    %618 = vmatprep.subr.bf16.mxu0 0
    %619 = vmatpush1.bf16.msra.mxu0 %v601
    %620 = vmatprep.subr.bf16.mxu0 0
    %621 = vmatpush1.bf16.msra.mxu0 %v602
    %622 = vmatprep.subr.bf16.mxu0 0
    %623 = vmatpush1.bf16.msra.mxu0 %v603
    %624 = vmatprep.subr.bf16.mxu0 0
    %625 = vmatpush1.bf16.msra.mxu0 %v604
    %626 = vmatprep.subr.bf16.mxu0 0
    %627 = vmatpush1.bf16.msra.mxu0 %v605
    %628 = vmatprep.subr.bf16.mxu0 0
    %629 = vmatpush1.bf16.msra.mxu0 %v606
    %630 = vmatprep.subr.bf16.mxu0 0
    %631 = vmatpush1.bf16.msra.mxu0 %v607
    %632 = vmatprep.subr.bf16.mxu0 0
    %633 = vmatpush1.bf16.msra.mxu0 0
    %634 = vmatprep.subr.bf16.mxu0 0
    %635 = vmatpush1.bf16.msra.mxu0 0
    %636 = vmatprep.subr.bf16.mxu0 0
    %637 = vmatpush1.bf16.msra.mxu0 0
    %638 = vmatprep.subr.bf16.mxu0 0
    %639 = vmatpush1.bf16.msra.mxu0 0
    %640 = vmatprep.subr.bf16.mxu0 0
    %641 = vmatpush1.bf16.msra.mxu0 0
    %642 = vmatprep.subr.bf16.mxu0 0
    %643 = vmatpush1.bf16.msra.mxu0 0
    %644 = vmatprep.subr.bf16.mxu0 0
    %645 = vmatpush1.bf16.msra.mxu0 0
    %646 = vmatprep.subr.bf16.mxu0 0
    %647 = vmatpush1.bf16.msra.mxu0 0
    %648 = vmatprep.mubr.bf16.mxu0 0
    %649 = vmatmul.mubr.bf16.gmra.mrb[0].mxu0 %v544
    %v650 = vpop.f32.mrb[0].mxu0
    %v651 = vadd.f32 %v566, %v650
    %v652 = vpop.f32.mrb[0].mxu0
    %v653 = vpop.f32.mrb[0].mxu0
    %v654 = vadd.f32 %v566, %v653
    %v655 = vpop.f32.mrb[0].mxu0
    %656 = vdwg.mxu0
    %657 = vst [vmem:[#allocation11] sm:$0xff] %v651
    %658 = vst [vmem:[#allocation11 + $0x8] sm:$0xff] %v654
    // Predicated region
    $region50: #{tpu_custom_call.1} parent=1 // pred_check
      _
    $region51: #{tpu_custom_call.1} parent=1 // pred_check_branch
      %660 = sbr.rel (0) target = $region53
    $region52: #{tpu_custom_call.1} parent=1 // pred_region
      %s662 = ssub.s32 256, 256
      %663 = vsyncadd [#allocation4], %s662
      %s664 = sshll.u32 [#allocation11], 4
      %s665 = int_to_ptr.vmem [resolvable:$true] %s664
      %670 = dma.vmem_to_hbm [thread:$0]  %s665, 256, %s7, [#allocation4], 128, 128, 8
    $region53: #{tpu_custom_call.1} parent=1 // pred_fallthru
      _
    // Predicated region
    $region54: #{tpu_custom_call.1} parent=1 // pred_check
      _
    $region55: #{tpu_custom_call.1} parent=1 // pred_check_branch
      %672 = sbr.rel (0) target = $region57
    $region56: #{tpu_custom_call.1} parent=1 // pred_region
      %673 = dma.done [#allocation4], 256
    $region57: #{tpu_custom_call.1} parent=1 // pred_fallthru
      _
    %674 = vsyncpa [#allocation3], 1
    %675 = vsyncpa [#allocation6], 1
    %676 = vsyncpa [#allocation9], 1
    %677 = vsyncpa [#allocation4], 1

</llo_original>
